<compile_context>
chip_gen: v7x
topology: tpu7x:2x2x1
jax: 0.10.0
libtpu: 0.0.40
codegen_flags: <defaults>
</compile_context>

<pallas_src>
import jax
import jax.numpy as jnp
from jax.experimental import pallas as pl
from jax.experimental.pallas import tpu as pltpu


# -----------------------------------------------------------------------------
# Pallas kernel: fused 1x1 conv over concatenated channel groups + bias + LeakyReLU
# -----------------------------------------------------------------------------
def _conv1x1_kernel(x_ref, s_ref, l_ref, wx_ref, ws_ref, wl_ref, b_ref, o_ref):
    # Split-weight accumulating dots == conv over the concatenated channels,
    # without materializing the concat (no lane shuffles, no VMEM temp).
    acc = jnp.dot(wx_ref[...], x_ref[...], preferred_element_type=jnp.float32)
    acc = acc + jnp.dot(ws_ref[...], s_ref[...], preferred_element_type=jnp.float32)
    acc = acc + jnp.dot(wl_ref[...], l_ref[...], preferred_element_type=jnp.float32)
    acc = acc + b_ref[...].astype(jnp.float32)   # (Cout, 1) broadcasts over lanes
    acc = jnp.maximum(acc, 0.2 * acc)            # LeakyReLU(negative_slope=0.2)
    o_ref[...] = acc.astype(o_ref.dtype)         # lane-dense (Cout, tile) store


# -----------------------------------------------------------------------------
# Host-side helpers (tile sizing / VMEM budgeting)
# -----------------------------------------------------------------------------
def _round_up(v, m):
    return ((v + m - 1) // m) * m


def _cdiv(a, b):
    return (a + b - 1) // b


def _vmem_budget_and_max_tile():
    """Generation-aware VMEM budget (bytes) and max lane-tile size."""
    cap = None
    try:
        cap = int(getattr(pltpu.get_tpu_info(), "vmem_capacity_bytes", 0)) or None
    except Exception:
        cap = None
    if cap is not None and cap <= (64 << 20):
        # v7x-class: 64 MiB physical per TensorCore -> stay well below.
        return 36 << 20, 2048
    # v5e / v6e (128 MiB physical) or unknown: scoped limit can be raised.
    return 48 << 20, 4096


def _pick_hw_tile(hw, n_batch, in_channels, out_channels, itemsize,
                  vmem_budget, max_tile):
    """Largest 128-multiple lane tile that fits the VMEM budget (including f32
    intermediates and double-buffered weights), then nudged so the total number
    of parallel grid steps is even (>= 2) for v7x's two TensorCores."""
    sub = max(8, 32 // itemsize)                       # sublane packing for dtype
    cin_sub = sum(_round_up(c, sub) for c in in_channels)
    cout_sub = _round_up(out_channels, sub)
    cout_f32 = _round_up(out_channels, 8)

    # Per-lane cost: double-buffered activation/output blocks + ~3 f32
    # temporaries (dot results / epilogue) living in the kernel body.
    per_lane = 2 * (cin_sub + cout_sub) * itemsize + 3 * cout_f32 * 4
    # Grid-invariant blocks (weights + bias), double-buffered by the pipeline.
    fixed = 2 * itemsize * (
        cout_sub * sum(_round_up(c, 128) for c in in_channels) + cout_sub * 128)
    avail = max(vmem_budget - fixed, per_lane * 128)

    tile = (avail // per_lane) // 128 * 128
    tile = max(128, min(tile, max_tile, _round_up(hw, 128)))

    # Megacore balance: prefer an even total step count without collapsing the
    # tile (never shrink below half of the bandwidth-optimal choice).
    total = n_batch * _cdiv(hw, tile)
    if total < 2 or total % 2 == 1:
        t = tile
        while t > 128:
            t -= 128
            c = n_batch * _cdiv(hw, t)
            if c >= 2 and c % 2 == 0:
                if 2 * t >= tile:
                    tile = t
                break
    return tile


# -----------------------------------------------------------------------------
# Fused skip-connection 1x1 conv (NCHW in / NCHW out)
# -----------------------------------------------------------------------------
def skip_conv1x1_nchw(x, skip_x, landmark, w, b, compute_dtype=None):
    """Fused channel-concat + 1x1 conv + bias + LeakyReLU(0.2).

    x:        (N, Cx, H, W)
    skip_x:   (N, Cs, H, W)
    landmark: (N, Cl, H, W)
    w:        (Cout, Cx+Cs+Cl)   -- Conv2d(1x1) weight with trailing 1x1 squeezed
    b:        (Cout,)
    compute_dtype: optional (e.g. jnp.bfloat16) to halve HBM traffic; f32
                   accumulation is kept inside the kernel either way.
    """
    N, Cx, H, W = x.shape
    Cs = skip_x.shape[1]
    Cl = landmark.shape[1]
    Cout, Cin = w.shape
    assert Cin == Cx + Cs + Cl
    dtype = jnp.dtype(compute_dtype) if compute_dtype is not None else x.dtype
    hw = H * W

    # Free reshape (no transpose, no pad): NCHW -> (N, C, H*W). A ragged H*W is
    # handled by Pallas' masked boundary block (cdiv grid), not by jnp.pad.
    def flat(t):
        return t.astype(dtype).reshape(N, t.shape[1], hw)

    xf, sf, lf = flat(x), flat(skip_x), flat(landmark)

    # Pre-split weights -> no in-kernel concat. Column order matches torch.cat.
    wx = w[:, :Cx].astype(dtype)
    ws = w[:, Cx:Cx + Cs].astype(dtype)
    wl = w[:, Cx + Cs:].astype(dtype)
    b2 = b.reshape(Cout, 1).astype(dtype)

    itemsize = jnp.dtype(dtype).itemsize
    vmem_budget, max_tile = _vmem_budget_and_max_tile()
    tile = _pick_hw_tile(hw, N, (Cx, Cs, Cl), Cout, itemsize,
                         vmem_budget, max_tile)
    grid = (N, pl.cdiv(hw, tile))

    out = pl.pallas_call(
        _conv1x1_kernel,
        out_shape=jax.ShapeDtypeStruct((N, Cout, hw), dtype),
        grid_spec=pltpu.PrefetchScalarGridSpec(
            num_scalar_prefetch=0,
            grid=grid,
            in_specs=[
                # Batch dim squeezed; channel dim = full extent; lanes = hw tile
                # (multiple of 128 -> satisfies the (8,128) rule even when the
                # last block is ragged; the ragged part is masked on store and
                # each output lane depends only on its own input lane).
                pl.BlockSpec((None, Cx, tile), lambda n, j: (n, 0, j)),
                pl.BlockSpec((None, Cs, tile), lambda n, j: (n, 0, j)),
                pl.BlockSpec((None, Cl, tile), lambda n, j: (n, 0, j)),
                # Grid-invariant weights / bias (constant index maps). Their
                # double-buffered footprint is accounted for in the tile picker.
                pl.BlockSpec((Cout, Cx), lambda n, j: (0, 0)),
                pl.BlockSpec((Cout, Cs), lambda n, j: (0, 0)),
                pl.BlockSpec((Cout, Cl), lambda n, j: (0, 0)),
                pl.BlockSpec((Cout, 1), lambda n, j: (0, 0)),
            ],
            out_specs=pl.BlockSpec((None, Cout, tile), lambda n, j: (n, 0, j)),
        ),
        compiler_params=pltpu.CompilerParams(
            dimension_semantics=("parallel", "parallel"),
            vmem_limit_bytes=int(vmem_budget),
        ),
    )(xf, sf, lf, wx, ws, wl, b2)

    return out.reshape(N, Cout, H, W)


# -----------------------------------------------------------------------------
# Module wrapper mirroring UnetSkipConnection.forward
# -----------------------------------------------------------------------------
class UnetSkipConnectionPallas:
    def __init__(self, key, in_channels: int, out_channels: int, resolution: int,
                 dtype=jnp.float32):
        self._in_channels = in_channels     # total channels after concat
        self._out_channels = out_channels
        self._resolution = resolution
        kw, kb = jax.random.split(key)
        # Conv2d(kernel_size=1) weight (Cout, Cin, 1, 1) -> stored as (Cout, Cin)
        scale = 1.0 / jnp.sqrt(jnp.float32(in_channels))
        self.w = (jax.random.normal(kw, (out_channels, in_channels),
                                    dtype=jnp.float32) * scale).astype(dtype)
        self.b = (jax.random.normal(kb, (out_channels,), dtype=jnp.float32)
                  * 0.01).astype(dtype)

    def __call__(self, inp):
        x, mask, batch = inp                      # x: NCHW
        skip_x, skip_mask = batch['unet_features'][self._resolution]
        del batch['unet_features'][self._resolution]
        landmarks = batch['landmarks_oh']
        res = x.shape[-1]
        landmark = landmarks[res]
        del batch['landmarks_oh'][res]

        assert (x.shape[1] + skip_x.shape[1] + landmark.shape[1]
                == self._in_channels)

        out = skip_conv1x1_nchw(x, skip_x, landmark, self.w, self.b)
        # TODO(synk): assumes conv2d_config selects a regular (non-partial,
        # non-gated) conv, so ConvAct returns the mask unchanged.
        return (out, mask, batch)


# -----------------------------------------------------------------------------
# Pure-JAX reference for correctness check
# -----------------------------------------------------------------------------
def _reference(x, skip_x, landmark, w, b):
    cat = jnp.concatenate([x, skip_x, landmark], axis=1)        # NCHW
    y = jnp.einsum('oc,nchw->nohw', w, cat) + b[None, :, None, None]
    return jnp.where(y > 0, y, 0.2 * y)


if __name__ == "__main__":
    key = jax.random.PRNGKey(0)
    k1, k2, k3, k4 = jax.random.split(key, 4)

    # Small shapes consistent with the module.
    N, H, W = 2, 16, 16
    C_X, C_SKIP, C_LM = 4, 4, 7           # concatenated -> 15 input channels
    C_OUT = 8
    RESOLUTION = W

    x = jax.random.normal(k1, (N, C_X, H, W), dtype=jnp.float32)
    skip_x = jax.random.normal(k2, (N, C_SKIP, H, W), dtype=jnp.float32)
    skip_mask = jnp.ones((N, 1, H, W), dtype=jnp.float32)
    landmark = (jax.random.uniform(k3, (N, C_LM, H, W)) > 0.8).astype(jnp.float32)
    mask = jnp.ones((N, 1, H, W), dtype=jnp.float32)

    batch = {
        'unet_features': {RESOLUTION: (skip_x, skip_mask)},
        'landmarks_oh': {W: landmark},
    }

    module = UnetSkipConnectionPallas(
        k4, in_channels=C_X + C_SKIP + C_LM, out_channels=C_OUT,
        resolution=RESOLUTION)

    out_x, out_mask, out_batch = module((x, mask, batch))
    out_x = jax.block_until_ready(out_x)

    ref = _reference(x, skip_x, landmark, module.w, module.b)
    assert out_x.shape == (N, C_OUT, H, W)
    assert out_mask.shape == mask.shape
    assert RESOLUTION not in out_batch['unet_features']
    assert W not in out_batch['landmarks_oh']
    assert jnp.allclose(out_x, ref, atol=1e-5, rtol=1e-5)

    print("KERNEL_OK")
</pallas_src>

<mosaic_0001>
module attributes {stable_mosaic.version = 11 : i64} {
  func.func @_conv1x1_kernel(%arg0: i32, %arg1: i32, %arg2: memref<1x4x256xf32, #tpu.memory_space<vmem>>, %arg3: memref<1x4x256xf32, #tpu.memory_space<vmem>>, %arg4: memref<1x7x256xf32, #tpu.memory_space<vmem>>, %arg5: memref<8x4xf32, #tpu.memory_space<vmem>>, %arg6: memref<8x4xf32, #tpu.memory_space<vmem>>, %arg7: memref<8x7xf32, #tpu.memory_space<vmem>>, %arg8: memref<8x1xf32, #tpu.memory_space<vmem>>, %arg9: memref<1x8x256xf32, #tpu.memory_space<vmem>>) attributes {dimension_semantics = [#tpu.dimension_semantics<parallel>, #tpu.dimension_semantics<parallel>], iteration_bounds = array<i64: 2, 1>, scalar_prefetch = 0 : i64, scratch_operands = 0 : i64, tpu.core_type = #tpu.core_type<tc>, window_params = [{transform_indices = @transform_0, window_bounds = array<i64: 1, 4, 256>}, {transform_indices = @transform_1, window_bounds = array<i64: 1, 4, 256>}, {transform_indices = @transform_2, window_bounds = array<i64: 1, 7, 256>}, {pipeline_mode = #tpu.pipeline_mode<synchronous>, transform_indices = @transform_3, window_bounds = array<i64: 8, 4>}, {pipeline_mode = #tpu.pipeline_mode<synchronous>, transform_indices = @transform_4, window_bounds = array<i64: 8, 4>}, {pipeline_mode = #tpu.pipeline_mode<synchronous>, transform_indices = @transform_5, window_bounds = array<i64: 8, 7>}, {pipeline_mode = #tpu.pipeline_mode<synchronous>, transform_indices = @transform_6, window_bounds = array<i64: 8, 1>}, {transform_indices = @transform_7, window_bounds = array<i64: 1, 8, 256>}]} {
    %c0 = arith.constant 0 : index
    %c0_0 = arith.constant 0 : index
    %0 = vector.load %arg5[%c0, %c0_0] : memref<8x4xf32, #tpu.memory_space<vmem>>, vector<8x4xf32>
    %c0_1 = arith.constant 0 : index
    %c0_2 = arith.constant 0 : index
    %c0_3 = arith.constant 0 : index
    %1 = vector.load %arg2[%c0_1, %c0_2, %c0_3] : memref<1x4x256xf32, #tpu.memory_space<vmem>>, vector<1x4x256xf32>
    %2 = vector.shape_cast %1 : vector<1x4x256xf32> to vector<4x256xf32>
    %cst = arith.constant dense<0.000000e+00> : vector<8x256xf32>
    %3 = tpu.matmul %0, %2, %cst {dimension_numbers = #tpu.dot_dimension_numbers<[1], [0], [0], [1], [0, 0, 1, 1], [], []>} : vector<8x4xf32>, vector<4x256xf32>, vector<8x256xf32> -> vector<8x256xf32>
    %c0_4 = arith.constant 0 : index
    %c0_5 = arith.constant 0 : index
    %4 = vector.load %arg6[%c0_4, %c0_5] : memref<8x4xf32, #tpu.memory_space<vmem>>, vector<8x4xf32>
    %c0_6 = arith.constant 0 : index
    %c0_7 = arith.constant 0 : index
    %c0_8 = arith.constant 0 : index
    %5 = vector.load %arg3[%c0_6, %c0_7, %c0_8] : memref<1x4x256xf32, #tpu.memory_space<vmem>>, vector<1x4x256xf32>
    %6 = vector.shape_cast %5 : vector<1x4x256xf32> to vector<4x256xf32>
    %cst_9 = arith.constant dense<0.000000e+00> : vector<8x256xf32>
    %7 = tpu.matmul %4, %6, %cst_9 {dimension_numbers = #tpu.dot_dimension_numbers<[1], [0], [0], [1], [0, 0, 1, 1], [], []>} : vector<8x4xf32>, vector<4x256xf32>, vector<8x256xf32> -> vector<8x256xf32>
    %8 = arith.addf %3, %7 : vector<8x256xf32>
    %c0_10 = arith.constant 0 : index
    %c0_11 = arith.constant 0 : index
    %9 = vector.load %arg7[%c0_10, %c0_11] : memref<8x7xf32, #tpu.memory_space<vmem>>, vector<8x7xf32>
    %c0_12 = arith.constant 0 : index
    %c0_13 = arith.constant 0 : index
    %c0_14 = arith.constant 0 : index
    %10 = vector.load %arg4[%c0_12, %c0_13, %c0_14] : memref<1x7x256xf32, #tpu.memory_space<vmem>>, vector<1x7x256xf32>
    %11 = vector.shape_cast %10 : vector<1x7x256xf32> to vector<7x256xf32>
    %cst_15 = arith.constant dense<0.000000e+00> : vector<8x256xf32>
    %12 = tpu.matmul %9, %11, %cst_15 {dimension_numbers = #tpu.dot_dimension_numbers<[1], [0], [0], [1], [0, 0, 1, 1], [], []>} : vector<8x7xf32>, vector<7x256xf32>, vector<8x256xf32> -> vector<8x256xf32>
    %13 = arith.addf %8, %12 : vector<8x256xf32>
    %c0_16 = arith.constant 0 : index
    %c0_17 = arith.constant 0 : index
    %14 = vector.load %arg8[%c0_16, %c0_17] : memref<8x1xf32, #tpu.memory_space<vmem>>, vector<8x1xf32>
    %15 = vector.broadcast %14 : vector<8x1xf32> to vector<8x256xf32>
    %16 = arith.addf %13, %15 : vector<8x256xf32>
    %cst_18 = arith.constant 2.000000e-01 : f32
    %17 = vector.broadcast %cst_18 : f32 to vector<8x256xf32>
    %18 = arith.mulf %17, %16 : vector<8x256xf32>
    %19 = arith.maximumf %16, %18 : vector<8x256xf32>
    %c0_19 = arith.constant 0 : index
    %c0_20 = arith.constant 0 : index
    %c0_21 = arith.constant 0 : index
    %20 = vector.load %arg9[%c0_19, %c0_20, %c0_21] : memref<1x8x256xf32, #tpu.memory_space<vmem>>, vector<1x8x256xf32>
    %21 = vector.shape_cast %20 : vector<1x8x256xf32> to vector<8x256xf32>
    %22 = vector.shape_cast %19 : vector<8x256xf32> to vector<1x8x256xf32>
    tpu.vector_store %arg9[%c0_19, %c0_20, %c0_21], %22 {strides = array<i32>} : memref<1x8x256xf32, #tpu.memory_space<vmem>>, vector<1x8x256xf32>,
    return
  }
  func.func @transform_0(%arg0: i32, %arg1: i32) -> (i32, i32, i32) {
    %c0_i32 = arith.constant 0 : i32
    %c0_i32_0 = arith.constant 0 : i32
    return %arg0, %c0_i32, %arg1 : i32, i32, i32
  }
  func.func @transform_1(%arg0: i32, %arg1: i32) -> (i32, i32, i32) {
    %c0_i32 = arith.constant 0 : i32
    %c0_i32_0 = arith.constant 0 : i32
    return %arg0, %c0_i32, %arg1 : i32, i32, i32
  }
  func.func @transform_2(%arg0: i32, %arg1: i32) -> (i32, i32, i32) {
    %c0_i32 = arith.constant 0 : i32
    %c0_i32_0 = arith.constant 0 : i32
    return %arg0, %c0_i32, %arg1 : i32, i32, i32
  }
  func.func @transform_3(%arg0: i32, %arg1: i32) -> (i32, i32) {
    %c0_i32 = arith.constant 0 : i32
    %c0_i32_0 = arith.constant 0 : i32
    %c0_i32_1 = arith.constant 0 : i32
    return %c0_i32, %c0_i32_0 : i32, i32
  }
  func.func @transform_4(%arg0: i32, %arg1: i32) -> (i32, i32) {
    %c0_i32 = arith.constant 0 : i32
    %c0_i32_0 = arith.constant 0 : i32
    %c0_i32_1 = arith.constant 0 : i32
    return %c0_i32, %c0_i32_0 : i32, i32
  }
  func.func @transform_5(%arg0: i32, %arg1: i32) -> (i32, i32) {
    %c0_i32 = arith.constant 0 : i32
    %c0_i32_0 = arith.constant 0 : i32
    %c0_i32_1 = arith.constant 0 : i32
    return %c0_i32, %c0_i32_0 : i32, i32
  }
  func.func @transform_6(%arg0: i32, %arg1: i32) -> (i32, i32) {
    %c0_i32 = arith.constant 0 : i32
    %c0_i32_0 = arith.constant 0 : i32
    %c0_i32_1 = arith.constant 0 : i32
    return %c0_i32, %c0_i32_0 : i32, i32
  }
  func.func @transform_7(%arg0: i32, %arg1: i32) -> (i32, i32, i32) {
    %c0_i32 = arith.constant 0 : i32
    %c0_i32_0 = arith.constant 0 : i32
    return %arg0, %c0_i32, %arg1 : i32, i32, i32
  }
}

</mosaic_0001>

<llo_original>
// kernel: tpu_custom_call.1
$region0: #{tpu_custom_call.1}
  #allocation0 [shape = 'u32[]', space=smem, size = 0x4, offset = 0x4, fixed_abs, tag = 'smem constant byte address 0x4 - core index']
  #allocation1 [shape = 'u32[144,128]{1,0:T(1,128)}', space=vmem, size = 0x12000, scoped, tag = 'internal scratch']
  %s0 = inlined_call_operand.vmem [shape: f32[2,4,256], index: 0, kind: input, shape index: {}]
  %s1 = inlined_call_operand.vmem [shape: f32[2,4,256], index: 1, kind: input, shape index: {}]
  %s2 = inlined_call_operand.vmem [shape: f32[2,7,256], index: 2, kind: input, shape index: {}]
  %s3 = inlined_call_operand.vmem [shape: f32[8,4], index: 3, kind: input, shape index: {}]
  %s4 = inlined_call_operand.vmem [shape: f32[8,4], index: 4, kind: input, shape index: {}]
  %s5 = inlined_call_operand.vmem [shape: f32[8,7], index: 5, kind: input, shape index: {}]
  %s6 = inlined_call_operand.vmem [shape: f32[8,1], index: 6, kind: input, shape index: {}]
  %s7 = inlined_call_operand.hbm [shape: f32[2,8,256], index: 7, kind: output, shape index: {}]
  %s8 = sld [smem:[#allocation0]]
  $region61: #{tpu_custom_call.1} parent=0
    _
  %s10 = ssub.s32 1, %s8
  %s11 = scalar_select 0, %s10, %s8
  $region1: #{tpu_custom_call.1} parent=0
    #allocation2 [shape = 'u8[16384]{0}', space=vmem, size = 0x4000, scoped, tag = 'output window, operand 0']
    #allocation3 [shape = 's32[2]{0}', space=sflag, size = 0x8, scoped, tag = 'scoped memory for tpu_custom_call.1']
    %12 = vsyncpa [#allocation3], 0
    %s13 = scalar_lea.sflag [#allocation3], 1
    %14 = vsyncpa %s13, 0
    loop: start=0, step=1, limit=4
    $region2: #{tpu_custom_call.1} parent=1 // loop_pre_header
      _
    $region3: #{tpu_custom_call.1} parent=1 // loop_header
      %s16 = sphi 0, %s20
      %p17 = scmp.ge.s32.totalorder %s16, 4
      %s23 = sphi 0, %s35
      %s24 = sphi 0, %s31
      %s25 = sphi 0, %s23
      %s26 = sphi 0, %s24
      %s27 = sphi 0, %s25
      %s28 = sphi 0, %s26
      %s40 = sphi 0, %s42
      %s43 = sphi 0, %s40
      %s44 = sphi 0, %s43
      %s60 = sphi 0, %s44
      %s68 = sphi 0, %s70
      %s71 = sphi 0, %s68
      %s72 = sphi 0, %s71
      %s88 = sphi 0, %s72
      %s96 = sphi 0, %s98
      %s99 = sphi 0, %s96
      %s100 = sphi 0, %s99
      %s116 = sphi 0, %s100
      %s120 = sphi 0, %s120
      %s122 = sphi 0, %s120
      %s123 = sphi 0, %s122
      %s137 = sphi 0, %s123
      %s141 = sphi 0, %s141
      %s143 = sphi 0, %s141
      %s144 = sphi 0, %s143
      %s158 = sphi 0, %s144
      %s162 = sphi 0, %s162
      %s164 = sphi 0, %s162
      %s165 = sphi 0, %s164
      %s179 = sphi 0, %s165
      %s183 = sphi 0, %s183
      %s185 = sphi 0, %s183
      %s186 = sphi 0, %s185
      %s200 = sphi 0, %s186
      %s208 = sphi 0, %s210
      %s211 = sphi 0, %s208
      %s212 = sphi 0, %s211
      %s228 = sphi 0, %s212
    $region4: #{tpu_custom_call.1} parent=1 // loop_header_branch
      %19 = sbr.rel (%p17) target = $region8
    $region5: #{tpu_custom_call.1} parent=1 // loop_body
      %s21 = ssub.s32 %s16, 1
      %s22 = ssub.s32 %s16, 2
      %s29 = sadd.s32 1, %s24
      %p30 = scmp.ge.s32.totalorder %s29, 1
      %s31 = scalar_select %p30, 0, %s29
      %s32 = sadd.s32 1, %s23
      %s33 = scalar_select %p30, %s32, %s23
      %p34 = scmp.ge.s32.totalorder %s33, 2
      %s35 = scalar_select %p34, 0, %s33
      %s36 = ssub.s32 %s23, %s35
      %s37 = ssub.s32 %s24, %s31
      %s38 = sor.u32 %s36, %s37
      %p39 = scmp.eq.s32.totalorder %s38, 0
      %s41 = sadd.s32 %s40, 1
      %s42 = scalar_select %p39, %s40, %s41
      %p45 = pneg %p39
      %p46 = scmp.eq.s32.totalorder %s16, 1
      %p47 = por %p45, %p46
      %p48 = scmp.ne.s32.totalorder %s40, %s43
      %p49 = scmp.eq.s32.totalorder %s16, 0
      %p50 = por %p48, %p49
      %p51 = scmp.ne.s32.totalorder %s40, %s43
      %p52 = scmp.eq.s32.totalorder %s21, 1
      %p53 = por %p51, %p52
      %p54 = scmp.ne.s32.totalorder %s43, %s44
      %p55 = scmp.eq.s32.totalorder %s21, 0
      %p56 = por %p54, %p55
      %p57 = scmp.ne.s32.totalorder %s43, %s44
      %p58 = scmp.eq.s32.totalorder %s22, 1
      %p59 = por %p57, %p58
      %p61 = scmp.ne.s32.totalorder %s44, %s60
      %p62 = scmp.eq.s32.totalorder %s22, 0
      %p63 = por %p61, %p62
      %s64 = ssub.s32 %s23, %s35
      %s65 = ssub.s32 %s24, %s31
      %s66 = sor.u32 %s64, %s65
      %p67 = scmp.eq.s32.totalorder %s66, 0
      %s69 = sadd.s32 %s68, 1
      %s70 = scalar_select %p67, %s68, %s69
      %p73 = pneg %p67
      %p74 = scmp.eq.s32.totalorder %s16, 1
      %p75 = por %p73, %p74
      %p76 = scmp.ne.s32.totalorder %s68, %s71
      %p77 = scmp.eq.s32.totalorder %s16, 0
      %p78 = por %p76, %p77
      %p79 = scmp.ne.s32.totalorder %s68, %s71
      %p80 = scmp.eq.s32.totalorder %s21, 1
      %p81 = por %p79, %p80
      %p82 = scmp.ne.s32.totalorder %s71, %s72
      %p83 = scmp.eq.s32.totalorder %s21, 0
      %p84 = por %p82, %p83
      %p85 = scmp.ne.s32.totalorder %s71, %s72
      %p86 = scmp.eq.s32.totalorder %s22, 1
      %p87 = por %p85, %p86
      %p89 = scmp.ne.s32.totalorder %s72, %s88
      %p90 = scmp.eq.s32.totalorder %s22, 0
      %p91 = por %p89, %p90
      %s92 = ssub.s32 %s23, %s35
      %s93 = ssub.s32 %s24, %s31
      %s94 = sor.u32 %s92, %s93
      %p95 = scmp.eq.s32.totalorder %s94, 0
      %s97 = sadd.s32 %s96, 1
      %s98 = scalar_select %p95, %s96, %s97
      %p101 = pneg %p95
      %p102 = scmp.eq.s32.totalorder %s16, 1
      %p103 = por %p101, %p102
      %p104 = scmp.ne.s32.totalorder %s96, %s99
      %p105 = scmp.eq.s32.totalorder %s16, 0
      %p106 = por %p104, %p105
      %p107 = scmp.ne.s32.totalorder %s96, %s99
      %p108 = scmp.eq.s32.totalorder %s21, 1
      %p109 = por %p107, %p108
      %p110 = scmp.ne.s32.totalorder %s99, %s100
      %p111 = scmp.eq.s32.totalorder %s21, 0
      %p112 = por %p110, %p111
      %p113 = scmp.ne.s32.totalorder %s99, %s100
      %p114 = scmp.eq.s32.totalorder %s22, 1
      %p115 = por %p113, %p114
      %p117 = scmp.ne.s32.totalorder %s100, %s116
      %p118 = scmp.eq.s32.totalorder %s22, 0
      %p119 = por %p117, %p118
      %s121 = sadd.s32 %s120, 1
      %p124 = scmp.eq.s32.totalorder %s16, 1
      %p125 = scmp.ne.s32.totalorder %s120, %s122
      %p126 = scmp.eq.s32.totalorder %s16, 0
      %p127 = por %p125, %p126
      %p128 = scmp.ne.s32.totalorder %s120, %s122
      %p129 = scmp.eq.s32.totalorder %s21, 1
      %p130 = por %p128, %p129
      %p131 = scmp.ne.s32.totalorder %s122, %s123
      %p132 = scmp.eq.s32.totalorder %s21, 0
      %p133 = por %p131, %p132
      %p134 = scmp.ne.s32.totalorder %s122, %s123
      %p135 = scmp.eq.s32.totalorder %s22, 1
      %p136 = por %p134, %p135
      %p138 = scmp.ne.s32.totalorder %s123, %s137
      %p139 = scmp.eq.s32.totalorder %s22, 0
      %p140 = por %p138, %p139
      %s142 = sadd.s32 %s141, 1
      %p145 = scmp.eq.s32.totalorder %s16, 1
      %p146 = scmp.ne.s32.totalorder %s141, %s143
      %p147 = scmp.eq.s32.totalorder %s16, 0
      %p148 = por %p146, %p147
      %p149 = scmp.ne.s32.totalorder %s141, %s143
      %p150 = scmp.eq.s32.totalorder %s21, 1
      %p151 = por %p149, %p150
      %p152 = scmp.ne.s32.totalorder %s143, %s144
      %p153 = scmp.eq.s32.totalorder %s21, 0
      %p154 = por %p152, %p153
      %p155 = scmp.ne.s32.totalorder %s143, %s144
      %p156 = scmp.eq.s32.totalorder %s22, 1
      %p157 = por %p155, %p156
      %p159 = scmp.ne.s32.totalorder %s144, %s158
      %p160 = scmp.eq.s32.totalorder %s22, 0
      %p161 = por %p159, %p160
      %s163 = sadd.s32 %s162, 1
      %p166 = scmp.eq.s32.totalorder %s16, 1
      %p167 = scmp.ne.s32.totalorder %s162, %s164
      %p168 = scmp.eq.s32.totalorder %s16, 0
      %p169 = por %p167, %p168
      %p170 = scmp.ne.s32.totalorder %s162, %s164
      %p171 = scmp.eq.s32.totalorder %s21, 1
      %p172 = por %p170, %p171
      %p173 = scmp.ne.s32.totalorder %s164, %s165
      %p174 = scmp.eq.s32.totalorder %s21, 0
      %p175 = por %p173, %p174
      %p176 = scmp.ne.s32.totalorder %s164, %s165
      %p177 = scmp.eq.s32.totalorder %s22, 1
      %p178 = por %p176, %p177
      %p180 = scmp.ne.s32.totalorder %s165, %s179
      %p181 = scmp.eq.s32.totalorder %s22, 0
      %p182 = por %p180, %p181
      %s184 = sadd.s32 %s183, 1
      %p187 = scmp.eq.s32.totalorder %s16, 1
      %p188 = scmp.ne.s32.totalorder %s183, %s185
      %p189 = scmp.eq.s32.totalorder %s16, 0
      %p190 = por %p188, %p189
      %p191 = scmp.ne.s32.totalorder %s183, %s185
      %p192 = scmp.eq.s32.totalorder %s21, 1
      %p193 = por %p191, %p192
      %p194 = scmp.ne.s32.totalorder %s185, %s186
      %p195 = scmp.eq.s32.totalorder %s21, 0
      %p196 = por %p194, %p195
      %p197 = scmp.ne.s32.totalorder %s185, %s186
      %p198 = scmp.eq.s32.totalorder %s22, 1
      %p199 = por %p197, %p198
      %p201 = scmp.ne.s32.totalorder %s186, %s200
      %p202 = scmp.eq.s32.totalorder %s22, 0
      %p203 = por %p201, %p202
      %s204 = ssub.s32 %s23, %s35
      %s205 = ssub.s32 %s24, %s31
      %s206 = sor.u32 %s204, %s205
      %p207 = scmp.eq.s32.totalorder %s206, 0
      %s209 = sadd.s32 %s208, 1
      %s210 = scalar_select %p207, %s208, %s209
      %p213 = pneg %p207
      %p214 = scmp.eq.s32.totalorder %s16, 1
      %p215 = por %p213, %p214
      %p216 = scmp.ne.s32.totalorder %s208, %s211
      %p217 = scmp.eq.s32.totalorder %s16, 0
      %p218 = por %p216, %p217
      %p219 = scmp.ne.s32.totalorder %s208, %s211
      %p220 = scmp.eq.s32.totalorder %s21, 1
      %p221 = por %p219, %p220
      %p222 = scmp.ne.s32.totalorder %s211, %s212
      %p223 = scmp.eq.s32.totalorder %s21, 0
      %p224 = por %p222, %p223
      %p225 = scmp.ne.s32.totalorder %s211, %s212
      %p226 = scmp.eq.s32.totalorder %s22, 1
      %p227 = por %p225, %p226
      %p229 = scmp.ne.s32.totalorder %s212, %s228
      %p230 = scmp.eq.s32.totalorder %s22, 0
      %p231 = por %p229, %p230
      %p232 = scmp.le.s32.totalorder 1, %s16
      %p233 = scmp.lt.s32.totalorder %s16, 3
      %p234 = pnand %p232, %p233
      %p235 = pneg %p234
      // Predicated region
      $region9: #{tpu_custom_call.1} parent=5 // pred_check
        _
      $region10: #{tpu_custom_call.1} parent=5 // pred_check_branch
        %237 = sbr.rel (%p234) target = $region12
      $region11: #{tpu_custom_call.1} parent=5 // pred_region
        %s238 = ssub.s32 %s16, 1
        // Predicated region
        $region13: #{tpu_custom_call.1} parent=11 // pred_check
          %p239 = pneg %p133
        $region14: #{tpu_custom_call.1} parent=11 // pred_check_branch
          %241 = sbr.rel (%p239) target = $region16
        $region15: #{tpu_custom_call.1} parent=11 // pred_region
          _
        $region16: #{tpu_custom_call.1} parent=11 // pred_fallthru
          _
        // Predicated region
        $region17: #{tpu_custom_call.1} parent=11 // pred_check
          %p242 = pneg %p154
        $region18: #{tpu_custom_call.1} parent=11 // pred_check_branch
          %244 = sbr.rel (%p242) target = $region20
        $region19: #{tpu_custom_call.1} parent=11 // pred_region
          _
        $region20: #{tpu_custom_call.1} parent=11 // pred_fallthru
          _
        // Predicated region
        $region21: #{tpu_custom_call.1} parent=11 // pred_check
          %p245 = pneg %p175
        $region22: #{tpu_custom_call.1} parent=11 // pred_check_branch
          %247 = sbr.rel (%p245) target = $region24
        $region23: #{tpu_custom_call.1} parent=11 // pred_region
          _
        $region24: #{tpu_custom_call.1} parent=11 // pred_fallthru
          _
        // Predicated region
        $region25: #{tpu_custom_call.1} parent=11 // pred_check
          %p248 = pneg %p196
        $region26: #{tpu_custom_call.1} parent=11 // pred_check_branch
          %250 = sbr.rel (%p248) target = $region28
        $region27: #{tpu_custom_call.1} parent=11 // pred_region
          _
        $region28: #{tpu_custom_call.1} parent=11 // pred_fallthru
          _
      $region12: #{tpu_custom_call.1} parent=5 // pred_fallthru
        _
      %p251 = scmp.lt.s32.totalorder %s16, 2
      // Predicated region
      $region29: #{tpu_custom_call.1} parent=5 // pred_check
        %p252 = pneg %p251
      $region30: #{tpu_custom_call.1} parent=5 // pred_check_branch
        %254 = sbr.rel (%p252) target = $region32
      $region31: #{tpu_custom_call.1} parent=5 // pred_region
        // Predicated region
        $region33: #{tpu_custom_call.1} parent=31 // pred_check
          %p255 = pneg %p50
        $region34: #{tpu_custom_call.1} parent=31 // pred_check_branch
          %257 = sbr.rel (%p255) target = $region36
        $region35: #{tpu_custom_call.1} parent=31 // pred_region
          %s258 = smul.u32 2, %s24
          %p259 = scmp.lt.s32.totalorder %s23, 1
          %s260 = scalar_select %p259, %s23, 1
          %p261 = scmp.lt.s32.totalorder %s258, 1
          %s262 = scalar_select %p261, %s258, 1
          %s263 = smul.addr %s260, 2
          %s264 = sadd.s32 %s262, %s263
          %s265 = smul.addr %s264, 4
          %s266 = scalar_lea.vmem %s0, %s265
          %s267 = smul.u32 2, %s24
        $region36: #{tpu_custom_call.1} parent=31 // pred_fallthru
          _
        // Predicated region
        $region37: #{tpu_custom_call.1} parent=31 // pred_check
          %p268 = pneg %p78
        $region38: #{tpu_custom_call.1} parent=31 // pred_check_branch
          %270 = sbr.rel (%p268) target = $region40
        $region39: #{tpu_custom_call.1} parent=31 // pred_region
          %s271 = smul.u32 2, %s24
          %p272 = scmp.lt.s32.totalorder %s23, 1
          %s273 = scalar_select %p272, %s23, 1
          %p274 = scmp.lt.s32.totalorder %s271, 1
          %s275 = scalar_select %p274, %s271, 1
          %s276 = smul.addr %s273, 2
          %s277 = sadd.s32 %s275, %s276
          %s278 = smul.addr %s277, 4
          %s279 = scalar_lea.vmem %s1, %s278
          %s280 = smul.u32 2, %s24
        $region40: #{tpu_custom_call.1} parent=31 // pred_fallthru
          _
        // Predicated region
        $region41: #{tpu_custom_call.1} parent=31 // pred_check
          %p281 = pneg %p106
        $region42: #{tpu_custom_call.1} parent=31 // pred_check_branch
          %283 = sbr.rel (%p281) target = $region44
        $region43: #{tpu_custom_call.1} parent=31 // pred_region
          %s284 = smul.u32 2, %s24
          %p285 = scmp.lt.s32.totalorder %s23, 1
          %s286 = scalar_select %p285, %s23, 1
          %p287 = scmp.lt.s32.totalorder %s284, 1
          %s288 = scalar_select %p287, %s284, 1
          %s289 = smul.addr %s286, 2
          %s290 = sadd.s32 %s288, %s289
          %s291 = smul.addr %s290, 8
          %s292 = scalar_lea.vmem %s2, %s291
          %s293 = smul.u32 2, %s24
        $region44: #{tpu_custom_call.1} parent=31 // pred_fallthru
          _
      $region32: #{tpu_custom_call.1} parent=5 // pred_fallthru
        _
      %p294 = scmp.le.s32.totalorder 1, %s16
      %p295 = scmp.lt.s32.totalorder %s16, 3
      %p296 = pnand %p294, %p295
      %p297 = pneg %p296
      // Predicated region
      $region45: #{tpu_custom_call.1} parent=5 // pred_check
        _
      $region46: #{tpu_custom_call.1} parent=5 // pred_check_branch
        %299 = sbr.rel (%p296) target = $region48
      $region47: #{tpu_custom_call.1} parent=5 // pred_region
        %s300 = ssub.s32 %s16, 1
        %s301 = smul.u32 2, %s26
        %p302 = scmp.lt.s32.totalorder %s25, 1
        %s303 = scalar_select %p302, %s25, 1
        %p304 = scmp.lt.s32.totalorder %s301, 1
        %s305 = scalar_select %p304, %s301, 1
        %s306 = smul.addr %s303, 2
        %s307 = sadd.s32 %s305, %s306
        %s308 = smul.addr %s307, 4
        %s309 = scalar_lea.vmem %s0, %s308
        %p310 = pneg %p56
        %p311 = pneg %p53
        %s312 = smul.u32 2, %s26
        %p313 = scmp.lt.s32.totalorder %s25, 1
        %s314 = scalar_select %p313, %s25, 1
        %p315 = scmp.lt.s32.totalorder %s312, 1
        %s316 = scalar_select %p315, %s312, 1
        %s317 = smul.addr %s314, 2
        %s318 = sadd.s32 %s316, %s317
        %s319 = smul.addr %s318, 4
        %s320 = scalar_lea.vmem %s1, %s319
        %p321 = pneg %p84
        %p322 = pneg %p81
        %s323 = smul.u32 2, %s26
        %p324 = scmp.lt.s32.totalorder %s25, 1
        %s325 = scalar_select %p324, %s25, 1
        %p326 = scmp.lt.s32.totalorder %s323, 1
        %s327 = scalar_select %p326, %s323, 1
        %s328 = smul.addr %s325, 2
        %s329 = sadd.s32 %s327, %s328
        %s330 = smul.addr %s329, 8
        %s331 = scalar_lea.vmem %s2, %s330
        %p332 = pneg %p112
        %p333 = pneg %p109
        %p334 = pneg %p133
        %p335 = pneg %p130
        %p336 = pneg %p154
        %p337 = pneg %p151
        %p338 = pneg %p175
        %p339 = pneg %p172
        %p340 = pneg %p196
        %p341 = pneg %p193
        %p342 = pneg %p224
        %p343 = pneg %p221
        %s344 = sand.u32 %s211, 1
        %s345 = scalar_lea.sflag [#allocation3], %s344
        %s346 = sand.u32 %s211, 1
        %s347 = smul.addr %s346, 16
        %s348 = scalar_lea.vmem [#allocation2], %s347
        %s349 = smul.u32 2, %s26
        %p350 = scmp.lt.s32.totalorder %s25, 1
        %s351 = scalar_select %p350, %s25, 1
        %p352 = scmp.lt.s32.totalorder %s349, 1
        %s353 = scalar_select %p352, %s349, 1
        %s354 = smul.addr %s351, 2
        %s355 = sadd.s32 %s353, %s354
        %s356 = smul.addr %s355, 4
        %s357 = scalar_lea.vmem %s0, %s356
        %s358 = smul.u32 2, %s26
        %s359 = smul.u32 2, %s26
        %p360 = scmp.lt.s32.totalorder %s25, 1
        %s361 = scalar_select %p360, %s25, 1
        %p362 = scmp.lt.s32.totalorder %s359, 1
        %s363 = scalar_select %p362, %s359, 1
        %s364 = smul.addr %s361, 2
        %s365 = sadd.s32 %s363, %s364
        %s366 = smul.addr %s365, 4
        %s367 = scalar_lea.vmem %s1, %s366
        %s368 = smul.u32 2, %s26
        %s369 = smul.u32 2, %s26
        %p370 = scmp.lt.s32.totalorder %s25, 1
        %s371 = scalar_select %p370, %s25, 1
        %p372 = scmp.lt.s32.totalorder %s369, 1
        %s373 = scalar_select %p372, %s369, 1
        %s374 = smul.addr %s371, 2
        %s375 = sadd.s32 %s373, %s374
        %s376 = smul.addr %s375, 8
        %s377 = scalar_lea.vmem %s2, %s376
        %s378 = smul.u32 2, %s26
        %s379 = smul.u32 2, %s26
        %v380 = vld [vmem:[%s3] sm:$0xff]
        %v381 = vld [vmem:[%s357] sm:$0xff]
        %v382 = vld [vmem:[%s4] sm:$0xff]
        %v383 = vld [vmem:[%s367] sm:$0xff]
        %v385 = vcombine.high %v383, %v383
        %vm386 = vcmask 31744
        %v388 = vsel %vm386, %v382, 0
        %vm390 = vcmask 1043456
        %v391 = vsel %vm390, %v383, 0
        %v393 = vsel %vm390, %v385, 0
        %395 = vmatprep.subr.mxu0 %v393
        %396 = vmatpush1.msra.mxu0 %v391
        %397 = vmatprep.subr.mxu0 0.0
        %398 = vmatpush1.msra.mxu0 0.0
        %399 = vmatprep.subr.mxu0 0.0
        %400 = vmatpush1.msra.mxu0 0.0
        %401 = vmatprep.subr.mxu0 0.0
        %402 = vmatpush1.msra.mxu0 0.0
        %403 = vmatprep.subr.mxu0 0.0
        %404 = vmatpush1.msra.mxu0 0.0
        %405 = vmatprep.subr.mxu0 0.0
        %406 = vmatpush1.msra.mxu0 0.0
        %407 = vmatprep.subr.mxu0 0.0
        %408 = vmatpush1.msra.mxu0 0.0
        %409 = vmatprep.subr.mxu0 0.0
        %410 = vmatpush1.msra.mxu0 0.0
        %411 = vmatprep.subr.mxu0 0.0
        %412 = vmatpush1.msra.mxu0 0.0
        %413 = vmatprep.subr.mxu0 0.0
        %414 = vmatpush1.msra.mxu0 0.0
        %415 = vmatprep.subr.mxu0 0.0
        %416 = vmatpush1.msra.mxu0 0.0
        %417 = vmatprep.subr.mxu0 0.0
        %418 = vmatpush1.msra.mxu0 0.0
        %419 = vmatprep.subr.mxu0 0.0
        %420 = vmatpush1.msra.mxu0 0.0
        %421 = vmatprep.subr.mxu0 0.0
        %422 = vmatpush1.msra.mxu0 0.0
        %423 = vmatprep.subr.mxu0 0.0
        %424 = vmatpush1.msra.mxu0 0.0
        %425 = vmatprep.subr.mxu0 0.0
        %426 = vmatpush1.msra.mxu0 0.0
        %427 = vmatprep.subr.mxu0 0.0
        %428 = vmatpush1.msra.mxu0 0.0
        %429 = vmatprep.subr.mxu0 0.0
        %430 = vmatpush1.msra.mxu0 0.0
        %431 = vmatprep.subr.mxu0 0.0
        %432 = vmatpush1.msra.mxu0 0.0
        %433 = vmatprep.subr.mxu0 0.0
        %434 = vmatpush1.msra.mxu0 0.0
        %435 = vmatprep.subr.mxu0 0.0
        %436 = vmatpush1.msra.mxu0 0.0
        %437 = vmatprep.subr.mxu0 0.0
        %438 = vmatpush1.msra.mxu0 0.0
        %439 = vmatprep.subr.mxu0 0.0
        %440 = vmatpush1.msra.mxu0 0.0
        %441 = vmatprep.subr.mxu0 0.0
        %442 = vmatpush1.msra.mxu0 0.0
        %443 = vmatprep.subr.mxu0 0.0
        %444 = vmatpush1.msra.mxu0 0.0
        %445 = vmatprep.subr.mxu0 0.0
        %446 = vmatpush1.msra.mxu0 0.0
        %447 = vmatprep.subr.mxu0 0.0
        %448 = vmatpush1.msra.mxu0 0.0
        %449 = vmatprep.subr.mxu0 0.0
        %450 = vmatpush1.msra.mxu0 0.0
        %451 = vmatprep.subr.mxu0 0.0
        %452 = vmatpush1.msra.mxu0 0.0
        %453 = vmatprep.subr.mxu0 0.0
        %454 = vmatpush1.msra.mxu0 0.0
        %455 = vmatprep.subr.mxu0 0.0
        %456 = vmatpush1.msra.mxu0 0.0
        %457 = vmatprep.subr.mxu0 0.0
        %458 = vmatpush1.msra.mxu0 0.0
        %459 = vmatprep.mubr.f32.mxu0 0.0
        %460 = vmatmul.mubr.f32.gmra.mrb[0].mxu0 %v388
        %v461 = vpop.f32.mrb[0].mxu0
        %v462 = vadd.f32 0.0, %v461
        %v463 = vpop.f32.mrb[0].mxu0
        %v464 = vadd.f32 0.0, %v463
        %465 = vdwg.mxu0
        %v467 = vcombine.high %v381, %v381
        %v469 = vsel %vm386, %v380, 0
        %v471 = vsel %vm390, %v381, 0
        %v473 = vsel %vm390, %v467, 0
        %475 = vmatprep.subr.mxu0 %v473
        %476 = vmatpush1.msra.mxu0 %v471
        %477 = vmatprep.subr.mxu0 0.0
        %478 = vmatpush1.msra.mxu0 0.0
        %479 = vmatprep.subr.mxu0 0.0
        %480 = vmatpush1.msra.mxu0 0.0
        %481 = vmatprep.subr.mxu0 0.0
        %482 = vmatpush1.msra.mxu0 0.0
        %483 = vmatprep.subr.mxu0 0.0
        %484 = vmatpush1.msra.mxu0 0.0
        %485 = vmatprep.subr.mxu0 0.0
        %486 = vmatpush1.msra.mxu0 0.0
        %487 = vmatprep.subr.mxu0 0.0
        %488 = vmatpush1.msra.mxu0 0.0
        %489 = vmatprep.subr.mxu0 0.0
        %490 = vmatpush1.msra.mxu0 0.0
        %491 = vmatprep.subr.mxu0 0.0
        %492 = vmatpush1.msra.mxu0 0.0
        %493 = vmatprep.subr.mxu0 0.0
        %494 = vmatpush1.msra.mxu0 0.0
        %495 = vmatprep.subr.mxu0 0.0
        %496 = vmatpush1.msra.mxu0 0.0
        %497 = vmatprep.subr.mxu0 0.0
        %498 = vmatpush1.msra.mxu0 0.0
        %499 = vmatprep.subr.mxu0 0.0
        %500 = vmatpush1.msra.mxu0 0.0
        %501 = vmatprep.subr.mxu0 0.0
        %502 = vmatpush1.msra.mxu0 0.0
        %503 = vmatprep.subr.mxu0 0.0
        %504 = vmatpush1.msra.mxu0 0.0
        %505 = vmatprep.subr.mxu0 0.0
        %506 = vmatpush1.msra.mxu0 0.0
        %507 = vmatprep.subr.mxu0 0.0
        %508 = vmatpush1.msra.mxu0 0.0
        %509 = vmatprep.subr.mxu0 0.0
        %510 = vmatpush1.msra.mxu0 0.0
        %511 = vmatprep.subr.mxu0 0.0
        %512 = vmatpush1.msra.mxu0 0.0
        %513 = vmatprep.subr.mxu0 0.0
        %514 = vmatpush1.msra.mxu0 0.0
        %515 = vmatprep.subr.mxu0 0.0
        %516 = vmatpush1.msra.mxu0 0.0
        %517 = vmatprep.subr.mxu0 0.0
        %518 = vmatpush1.msra.mxu0 0.0
        %519 = vmatprep.subr.mxu0 0.0
        %520 = vmatpush1.msra.mxu0 0.0
        %521 = vmatprep.subr.mxu0 0.0
        %522 = vmatpush1.msra.mxu0 0.0
        %523 = vmatprep.subr.mxu0 0.0
        %524 = vmatpush1.msra.mxu0 0.0
        %525 = vmatprep.subr.mxu0 0.0
        %526 = vmatpush1.msra.mxu0 0.0
        %527 = vmatprep.subr.mxu0 0.0
        %528 = vmatpush1.msra.mxu0 0.0
        %529 = vmatprep.subr.mxu0 0.0
        %530 = vmatpush1.msra.mxu0 0.0
        %531 = vmatprep.subr.mxu0 0.0
        %532 = vmatpush1.msra.mxu0 0.0
        %533 = vmatprep.subr.mxu0 0.0
        %534 = vmatpush1.msra.mxu0 0.0
        %535 = vmatprep.subr.mxu0 0.0
        %536 = vmatpush1.msra.mxu0 0.0
        %537 = vmatprep.subr.mxu0 0.0
        %538 = vmatpush1.msra.mxu0 0.0
        %539 = vmatprep.mubr.f32.mxu0 0.0
        %540 = vmatmul.mubr.f32.gmra.mrb[0].mxu0 %v469
        %v541 = vpop.f32.mrb[0].mxu0
        %v542 = vadd.f32 %v462, %v541
        %v543 = vpop.f32.mrb[0].mxu0
        %v544 = vadd.f32 %v464, %v543
        %545 = vdwg.mxu0
        %v546 = vld [vmem:[%s5] sm:$0xff]
        %v547 = vld [vmem:[%s377] sm:$0x7f]
        %v548 = vld [vmem:[%s377 + $0x8] sm:$0x7f]
        %vm549 = vcmask 56320
        %v551 = vsel %vm549, %v546, 0
        %vm553 = vcmask 1046528
        %v555 = vsel %vm553, %v547, 0
        %v558 = vsel %vm553, %v548, 0
        %560 = vmatprep.subr.mxu0 %v558
        %561 = vmatpush1.msra.mxu0 %v555
        %562 = vmatprep.subr.mxu0 0.0
        %563 = vmatpush1.msra.mxu0 0.0
        %564 = vmatprep.subr.mxu0 0.0
        %565 = vmatpush1.msra.mxu0 0.0
        %566 = vmatprep.subr.mxu0 0.0
        %567 = vmatpush1.msra.mxu0 0.0
        %568 = vmatprep.subr.mxu0 0.0
        %569 = vmatpush1.msra.mxu0 0.0
        %570 = vmatprep.subr.mxu0 0.0
        %571 = vmatpush1.msra.mxu0 0.0
        %572 = vmatprep.subr.mxu0 0.0
        %573 = vmatpush1.msra.mxu0 0.0
        %574 = vmatprep.subr.mxu0 0.0
        %575 = vmatpush1.msra.mxu0 0.0
        %576 = vmatprep.subr.mxu0 0.0
        %577 = vmatpush1.msra.mxu0 0.0
        %578 = vmatprep.subr.mxu0 0.0
        %579 = vmatpush1.msra.mxu0 0.0
        %580 = vmatprep.subr.mxu0 0.0
        %581 = vmatpush1.msra.mxu0 0.0
        %582 = vmatprep.subr.mxu0 0.0
        %583 = vmatpush1.msra.mxu0 0.0
        %584 = vmatprep.subr.mxu0 0.0
        %585 = vmatpush1.msra.mxu0 0.0
        %586 = vmatprep.subr.mxu0 0.0
        %587 = vmatpush1.msra.mxu0 0.0
        %588 = vmatprep.subr.mxu0 0.0
        %589 = vmatpush1.msra.mxu0 0.0
        %590 = vmatprep.subr.mxu0 0.0
        %591 = vmatpush1.msra.mxu0 0.0
        %592 = vmatprep.subr.mxu0 0.0
        %593 = vmatpush1.msra.mxu0 0.0
        %594 = vmatprep.subr.mxu0 0.0
        %595 = vmatpush1.msra.mxu0 0.0
        %596 = vmatprep.subr.mxu0 0.0
        %597 = vmatpush1.msra.mxu0 0.0
        %598 = vmatprep.subr.mxu0 0.0
        %599 = vmatpush1.msra.mxu0 0.0
        %600 = vmatprep.subr.mxu0 0.0
        %601 = vmatpush1.msra.mxu0 0.0
        %602 = vmatprep.subr.mxu0 0.0
        %603 = vmatpush1.msra.mxu0 0.0
        %604 = vmatprep.subr.mxu0 0.0
        %605 = vmatpush1.msra.mxu0 0.0
        %606 = vmatprep.subr.mxu0 0.0
        %607 = vmatpush1.msra.mxu0 0.0
        %608 = vmatprep.subr.mxu0 0.0
        %609 = vmatpush1.msra.mxu0 0.0
        %610 = vmatprep.subr.mxu0 0.0
        %611 = vmatpush1.msra.mxu0 0.0
        %612 = vmatprep.subr.mxu0 0.0
        %613 = vmatpush1.msra.mxu0 0.0
        %614 = vmatprep.subr.mxu0 0.0
        %615 = vmatpush1.msra.mxu0 0.0
        %616 = vmatprep.subr.mxu0 0.0
        %617 = vmatpush1.msra.mxu0 0.0
        %618 = vmatprep.subr.mxu0 0.0
        %619 = vmatpush1.msra.mxu0 0.0
        %620 = vmatprep.subr.mxu0 0.0
        %621 = vmatpush1.msra.mxu0 0.0
        %622 = vmatprep.subr.mxu0 0.0
        %623 = vmatpush1.msra.mxu0 0.0
        %624 = vmatprep.mubr.f32.mxu0 0.0
        %625 = vmatmul.mubr.f32.gmra.mrb[0].mxu0 %v551
        %v626 = vpop.f32.mrb[0].mxu0
        %v627 = vadd.f32 0.0, %v626
        %v628 = vpop.f32.mrb[0].mxu0
        %v629 = vadd.f32 0.0, %v628
        %630 = vdwg.mxu0
        %v631 = vadd.f32 %v542, %v627
        %v632 = vadd.f32 %v544, %v629
        %v633 = vld [vmem:[%s6] sm:$0xff]
        %635 = vset.pattern.permute.xlu0 0
        %636 = vperm.xlu0 %635, %v633
        %v637 = vpop.permute.xlu0 %636
        %v639 = vadd.f32 %v631, %v637
        %v640 = vadd.f32 %v632, %v637
        %v641 = vmul.f32 %v639, 0.2
        %v642 = vmul.f32 %v640, 0.2
        %v643 = vmax.f32 %v639, %v641
        %v644 = vmax.f32 %v640, %v642
        %645 = vst [vmem:[%s348] sm:$0xff] %v643
        %646 = vst [vmem:[%s348 + $0x8] sm:$0xff] %v644
        %s647 = sand.u32 %s211, 1
        %s648 = scalar_lea.sflag [#allocation3], %s647
        %s649 = sand.u32 %s211, 1
        %s650 = smul.addr %s649, 16
        %s651 = scalar_lea.vmem [#allocation2], %s650
        // Predicated region
        $region49: #{tpu_custom_call.1} parent=47 // pred_check
          %p652 = pneg %p221
        $region50: #{tpu_custom_call.1} parent=47 // pred_check_branch
          %654 = sbr.rel (%p652) target = $region52
        $region51: #{tpu_custom_call.1} parent=47 // pred_region
          %s655 = smul.u32 2, %s26
          %s657 = ssub.s32 256, 256
          %658 = vsyncadd %s648, %s657
          %s659 = smul.addr %s25, 2
          %s660 = sadd.s32 %s655, %s659
          %s661 = smul.addr %s660, 128
          %s662 = scalar_lea.hbm %s7, %s661
          %s664 = sshll.u32 %s651, 4
          %s665 = int_to_ptr.vmem [resolvable:$true] %s664
          %667 = dma.vmem_to_hbm [thread:$0]  %s665, 256, %s662, %s648
        $region52: #{tpu_custom_call.1} parent=47 // pred_fallthru
          _
      $region48: #{tpu_custom_call.1} parent=5 // pred_fallthru
        _
      %p668 = scmp.le.s32.totalorder 2, %s16
      // Predicated region
      $region53: #{tpu_custom_call.1} parent=5 // pred_check
        %p669 = pneg %p668
      $region54: #{tpu_custom_call.1} parent=5 // pred_check_branch
        %671 = sbr.rel (%p669) target = $region56
      $region55: #{tpu_custom_call.1} parent=5 // pred_region
        %s672 = ssub.s32 %s16, 2
        // Predicated region
        $region57: #{tpu_custom_call.1} parent=55 // pred_check
          %p673 = pneg %p227
        $region58: #{tpu_custom_call.1} parent=55 // pred_check_branch
          %675 = sbr.rel (%p673) target = $region60
        $region59: #{tpu_custom_call.1} parent=55 // pred_region
          %s676 = sand.u32 %s212, 1
          %s677 = scalar_lea.sflag [#allocation3], %s676
          %s678 = sand.u32 %s212, 1
          %s679 = smul.addr %s678, 16
          %s680 = scalar_lea.vmem [#allocation2], %s679
          %681 = dma.done %s677, 256
        $region60: #{tpu_custom_call.1} parent=55 // pred_fallthru
          _
      $region56: #{tpu_custom_call.1} parent=5 // pred_fallthru
        _
    $region6: #{tpu_custom_call.1} parent=1 // loop_footer
      %s20 = sadd.s32 1, %s16
    $region7: #{tpu_custom_call.1} parent=1 // loop_footer_branch
      %15 = sbr.rel target = $region3
    $region8: #{tpu_custom_call.1} parent=1 // loop_exit
      _
    %682 = vsyncpa [#allocation3], 1
    %s683 = scalar_lea.sflag [#allocation3], 1
    %684 = vsyncpa %s683, 1

</llo_original>
